<compile_context>
chip_gen: v5e
topology: v5e:2x2
jax: 0.10.0
libtpu: 0.0.40
codegen_flags: <defaults>
</compile_context>

<pallas_src>
import jax
import jax.numpy as jnp
import numpy as np
from jax import lax
from jax.experimental import pallas as pl
from jax.experimental.pallas import tpu as pltpu


# ----------------------------------------------------------------------------
# Kernel: embedding table in HBM, per-row DMA gather straight into out_ref.
# ----------------------------------------------------------------------------
def _make_hbm_gather_kernel(batch_block: int, context_size: int, vocab_size: int):
    Bb, T, V = batch_block, context_size, vocab_size
    inner_unroll = min(T, 8)

    def kernel(tok_ref, pos_ref, emb_hbm, out_ref, sem):
        # tok_ref : SMEM (B_pad*T,) int32   (scalar prefetch, flattened)
        # pos_ref : VMEM (T, E)             (position table, resident)
        # emb_hbm : HBM  (V, E)             (memory_space=pl.ANY, manual DMA)
        # out_ref : VMEM (Bb, T, E)         (output block; gather lands here)
        # sem     : shared DMA semaphore, shape (1,)
        base = pl.program_id(0) * (Bb * T)

        # 1) Issue every row-gather DMA first so they all overlap in flight.
        def issue_batch(bi, carry):
            row_base = base + bi * T          # one mul per batch row, no div/mod

            def issue_row(ti, c):
                # Clamp guards the HBM DMA against OOB row indices (an OOB DMA
                # is bounds-checked and would fault); valid inputs unaffected.
                idx = jnp.clip(tok_ref[row_base + ti], 0, V - 1)
                pltpu.make_async_copy(
                    emb_hbm.at[pl.ds(idx, 1), :],
                    out_ref.at[bi, pl.ds(ti, 1), :],
                    sem.at[0],
                ).start()
                return c

            return lax.fori_loop(0, T, issue_row, carry, unroll=inner_unroll)

        lax.fori_loop(0, Bb, issue_batch, 0)

        # 2) Retire all of them on the shared semaphore.  Every copy above has
        #    the identical (1, E) shape, so each wait retires exactly one copy;
        #    the dst slice names the real destination to keep the dependence
        #    on out_ref explicit before the dense add below.
        def wait_batch(bi, carry):
            def wait_row(ti, c):
                pltpu.make_async_copy(
                    emb_hbm.at[pl.ds(0, 1), :],            # shape-only source
                    out_ref.at[bi, pl.ds(ti, 1), :],
                    sem.at[0],
                ).wait()
                return c

            return lax.fori_loop(0, T, wait_row, carry, unroll=inner_unroll)

        lax.fori_loop(0, Bb, wait_batch, 0)

        # 3) One dense, lane/sublane-packed in-place position add.
        out_ref[...] = out_ref[...] + pos_ref[...][None, :, :]

    return kernel


# ----------------------------------------------------------------------------
# Kernel: small table kept VMEM-resident, gather is in-VMEM dynamic slicing.
# ----------------------------------------------------------------------------
def _make_vmem_gather_kernel(batch_block: int, context_size: int, vocab_size: int):
    Bb, T, V = batch_block, context_size, vocab_size
    inner_unroll = min(T, 8)

    def kernel(tok_ref, pos_ref, emb_ref, out_ref):
        # tok_ref : SMEM (B_pad*T,) int32
        # pos_ref : VMEM (T, E)
        # emb_ref : VMEM (V, E)   (whole table resident -- small-table fast path)
        # out_ref : VMEM (Bb, T, E)
        base = pl.program_id(0) * (Bb * T)

        for bi in range(Bb):                  # static outer loop (small Bb)
            row_base = base + bi * T

            def gather_row(ti, c, bi=bi, row_base=row_base):
                idx = jnp.clip(tok_ref[row_base + ti], 0, V - 1)
                out_ref[bi, pl.ds(ti, 1), :] = emb_ref[pl.ds(idx, 1), :]
                return c

            lax.fori_loop(0, T, gather_row, 0, unroll=inner_unroll)

        out_ref[...] = out_ref[...] + pos_ref[...][None, :, :]

    return kernel


# ----------------------------------------------------------------------------
# Wrapper.
# ----------------------------------------------------------------------------
def clip_embedding(
    tokens,
    token_emb,
    pos_emb,
    *,
    batch_block: int | None = None,
    force_hbm_gather: bool = False,
    vmem_block_budget_bytes: int = 24 * 1024 * 1024,
    resident_table_max_bytes: int = 8 * 1024 * 1024,
):
    """tokens: (B, T) int; token_emb: (V, E); pos_emb: (T, E) -> (B, T, E)."""
    B, T = tokens.shape
    V, E = token_emb.shape
    assert pos_emb.shape == (T, E), "context_size must match tokens' seq length"
    assert pos_emb.dtype == token_emb.dtype

    itemsize = jnp.dtype(token_emb.dtype).itemsize
    table_bytes = V * E * itemsize
    table_resident = (not force_hbm_gather) and table_bytes <= resident_table_max_bytes

    # ---- batch-block sizing from a generation-safe VMEM budget --------------
    # Double-buffered output block + resident position table (+ table if small).
    fixed_bytes = T * E * itemsize + (table_bytes if table_resident else 0)
    per_batch_row = 2 * T * E * itemsize
    bb = max(1, (vmem_block_budget_bytes - fixed_bytes) // per_batch_row)
    if batch_block is not None:
        bb = min(bb, batch_block)
    Bb = int(max(1, min(bb, B)))

    # Pad B up to a multiple of Bb (never shrink Bb -- prime B stays fast);
    # padded rows gather token id 0 and are sliced off after the call.
    num_blocks = pl.cdiv(B, Bb)
    B_pad = num_blocks * Bb
    tokens_flat = tokens.reshape(-1).astype(jnp.int32)   # flat -> tight SMEM padding
    if B_pad != B:
        tokens_flat = jnp.pad(tokens_flat, (0, (B_pad - B) * T))

    if table_resident:
        kernel = _make_vmem_gather_kernel(Bb, T, V)
        emb_spec = pl.BlockSpec((V, E), lambda i, tok: (0, 0))    # table resident
        scratch_shapes = []
    else:
        kernel = _make_hbm_gather_kernel(Bb, T, V)
        emb_spec = pl.BlockSpec(memory_space=pl.ANY)              # table in HBM
        scratch_shapes = [pltpu.SemaphoreType.DMA((1,))]          # one shared sem

    grid_spec = pltpu.PrefetchScalarGridSpec(
        num_scalar_prefetch=1,                                     # tokens -> SMEM
        grid=(num_blocks,),
        in_specs=[
            pl.BlockSpec((T, E), lambda i, tok: (0, 0)),           # position table
            emb_spec,                                              # embedding table
        ],
        out_specs=pl.BlockSpec((Bb, T, E), lambda i, tok: (i, 0, 0)),
        scratch_shapes=scratch_shapes,
    )

    out = pl.pallas_call(
        kernel,
        out_shape=jax.ShapeDtypeStruct((B_pad, T, E), token_emb.dtype),
        grid_spec=grid_spec,
        compiler_params=pltpu.CompilerParams(
            dimension_semantics=("parallel",),
            # 32 MiB scoped VMEM: raises v5e's 16 MiB default, matches v6e's
            # default, and stays well under v7x's 64 MiB physical per-TC VMEM.
            vmem_limit_bytes=32 * 1024 * 1024,
        ),
    )(tokens_flat, pos_emb, token_emb)

    return out[:B] if B_pad != B else out


# ----------------------------------------------------------------------------
# Demo / self-test.
# ----------------------------------------------------------------------------
if __name__ == "__main__":
    vocab_size = 64
    embed_size = 128
    context_size = 8
    batch = 5          # not a multiple of the batch block -> exercises padding

    key = jax.random.PRNGKey(0)
    k_tok, k_emb, k_pos = jax.random.split(key, 3)

    tokens = jax.random.randint(
        k_tok, (batch, context_size), 0, vocab_size, dtype=jnp.int32
    )
    # Random params so the gather + broadcast-add is actually exercised (the
    # module inits position_embedding to zeros, which would hide bugs).
    token_emb = jax.random.normal(k_emb, (vocab_size, embed_size), dtype=jnp.float32)
    pos_emb = 0.1 * jax.random.normal(
        k_pos, (context_size, embed_size), dtype=jnp.float32
    )

    # Pure-JAX reference: token_embedding(tokens) + position_embedding.
    ref = token_emb[tokens] + pos_emb[None, :, :]

    # Path 1: small-table fast path (table VMEM-resident, in-VMEM gather).
    out_fast = jax.block_until_ready(
        clip_embedding(tokens, token_emb, pos_emb, batch_block=2)
    )
    np.testing.assert_allclose(np.asarray(out_fast), np.asarray(ref), rtol=1e-6, atol=1e-6)

    # Path 2: large-table path (table stays in HBM, row DMA gather into out_ref).
    out_hbm = jax.block_until_ready(
        clip_embedding(tokens, token_emb, pos_emb, batch_block=2, force_hbm_gather=True)
    )
    np.testing.assert_allclose(np.asarray(out_hbm), np.asarray(ref), rtol=1e-6, atol=1e-6)

    print("KERNEL_OK")
</pallas_src>

<mosaic_0001>
module attributes {stable_mosaic.version = 11 : i64} {
  func.func @kernel(%arg0: i32, %arg1: memref<48xi32, #tpu.memory_space<smem>>, %arg2: memref<8x128xf32, #tpu.memory_space<vmem>>, %arg3: memref<64x128xf32, #tpu.memory_space<vmem>>, %arg4: memref<2x8x128xf32, #tpu.memory_space<vmem>>) attributes {dimension_semantics = [#tpu.dimension_semantics<parallel>], iteration_bounds = array<i64: 3>, scalar_prefetch = 1 : i64, scratch_operands = 0 : i64, tpu.core_type = #tpu.core_type<tc>, window_params = [{pipeline_mode = #tpu.pipeline_mode<synchronous>, transform_indices = @transform_0, window_bounds = array<i64: 8, 128>}, {pipeline_mode = #tpu.pipeline_mode<synchronous>, transform_indices = @transform_1, window_bounds = array<i64: 64, 128>}, {transform_indices = @transform_2, window_bounds = array<i64: 2, 8, 128>}]} {
    %c16_i32 = arith.constant 16 : i32
    %0 = arith.muli %arg0, %c16_i32 : i32
    %c0_i32 = arith.constant 0 : i32
    %1 = arith.addi %0, %c0_i32 : i32
    %c0_i32_0 = arith.constant 0 : i32
    %2 = arith.addi %1, %c0_i32_0 : i32
    %3 = arith.index_cast %2 : i32 to index
    %4 = memref.load %arg1[%3] : memref<48xi32, #tpu.memory_space<smem>>
    %c0_i32_1 = arith.constant 0 : i32
    %c63_i32 = arith.constant 63 : i32
    %5 = arith.maxsi %c0_i32_1, %4 : i32
    %6 = arith.minsi %c63_i32, %5 : i32
    %7 = arith.index_cast %6 : i32 to index
    %c0 = arith.constant 0 : index
    %8 = vector.load %arg3[%7, %c0] : memref<64x128xf32, #tpu.memory_space<vmem>>, vector<1x128xf32>
    %c0_2 = arith.constant 0 : index
    %9 = arith.index_cast %c0_i32_0 : i32 to index
    %c0_3 = arith.constant 0 : index
    %10 = vector.load %arg4[%c0_2, %9, %c0_3] : memref<2x8x128xf32, #tpu.memory_space<vmem>>, vector<1x1x128xf32>
    %11 = vector.shape_cast %10 : vector<1x1x128xf32> to vector<1x128xf32>
    %12 = vector.shape_cast %8 : vector<1x128xf32> to vector<1x1x128xf32>
    tpu.vector_store %arg4[%c0_2, %9, %c0_3], %12 {strides = array<i32>} : memref<2x8x128xf32, #tpu.memory_space<vmem>>, vector<1x1x128xf32>,
    %c1_i32 = arith.constant 1 : i32
    %13 = arith.addi %1, %c1_i32 : i32
    %14 = arith.index_cast %13 : i32 to index
    %15 = memref.load %arg1[%14] : memref<48xi32, #tpu.memory_space<smem>>
    %c0_i32_4 = arith.constant 0 : i32
    %c63_i32_5 = arith.constant 63 : i32
    %16 = arith.maxsi %c0_i32_4, %15 : i32
    %17 = arith.minsi %c63_i32_5, %16 : i32
    %18 = arith.index_cast %17 : i32 to index
    %c0_6 = arith.constant 0 : index
    %19 = vector.load %arg3[%18, %c0_6] : memref<64x128xf32, #tpu.memory_space<vmem>>, vector<1x128xf32>
    %c0_7 = arith.constant 0 : index
    %20 = arith.index_cast %c1_i32 : i32 to index
    %c0_8 = arith.constant 0 : index
    %21 = vector.load %arg4[%c0_7, %20, %c0_8] : memref<2x8x128xf32, #tpu.memory_space<vmem>>, vector<1x1x128xf32>
    %22 = vector.shape_cast %21 : vector<1x1x128xf32> to vector<1x128xf32>
    %23 = vector.shape_cast %19 : vector<1x128xf32> to vector<1x1x128xf32>
    tpu.vector_store %arg4[%c0_7, %20, %c0_8], %23 {strides = array<i32>} : memref<2x8x128xf32, #tpu.memory_space<vmem>>, vector<1x1x128xf32>,
    %c2_i32 = arith.constant 2 : i32
    %24 = arith.addi %1, %c2_i32 : i32
    %25 = arith.index_cast %24 : i32 to index
    %26 = memref.load %arg1[%25] : memref<48xi32, #tpu.memory_space<smem>>
    %c0_i32_9 = arith.constant 0 : i32
    %c63_i32_10 = arith.constant 63 : i32
    %27 = arith.maxsi %c0_i32_9, %26 : i32
    %28 = arith.minsi %c63_i32_10, %27 : i32
    %29 = arith.index_cast %28 : i32 to index
    %c0_11 = arith.constant 0 : index
    %30 = vector.load %arg3[%29, %c0_11] : memref<64x128xf32, #tpu.memory_space<vmem>>, vector<1x128xf32>
    %c0_12 = arith.constant 0 : index
    %31 = arith.index_cast %c2_i32 : i32 to index
    %c0_13 = arith.constant 0 : index
    %32 = vector.load %arg4[%c0_12, %31, %c0_13] : memref<2x8x128xf32, #tpu.memory_space<vmem>>, vector<1x1x128xf32>
    %33 = vector.shape_cast %32 : vector<1x1x128xf32> to vector<1x128xf32>
    %34 = vector.shape_cast %30 : vector<1x128xf32> to vector<1x1x128xf32>
    tpu.vector_store %arg4[%c0_12, %31, %c0_13], %34 {strides = array<i32>} : memref<2x8x128xf32, #tpu.memory_space<vmem>>, vector<1x1x128xf32>,
    %c3_i32 = arith.constant 3 : i32
    %35 = arith.addi %1, %c3_i32 : i32
    %36 = arith.index_cast %35 : i32 to index
    %37 = memref.load %arg1[%36] : memref<48xi32, #tpu.memory_space<smem>>
    %c0_i32_14 = arith.constant 0 : i32
    %c63_i32_15 = arith.constant 63 : i32
    %38 = arith.maxsi %c0_i32_14, %37 : i32
    %39 = arith.minsi %c63_i32_15, %38 : i32
    %40 = arith.index_cast %39 : i32 to index
    %c0_16 = arith.constant 0 : index
    %41 = vector.load %arg3[%40, %c0_16] : memref<64x128xf32, #tpu.memory_space<vmem>>, vector<1x128xf32>
    %c0_17 = arith.constant 0 : index
    %42 = arith.index_cast %c3_i32 : i32 to index
    %c0_18 = arith.constant 0 : index
    %43 = vector.load %arg4[%c0_17, %42, %c0_18] : memref<2x8x128xf32, #tpu.memory_space<vmem>>, vector<1x1x128xf32>
    %44 = vector.shape_cast %43 : vector<1x1x128xf32> to vector<1x128xf32>
    %45 = vector.shape_cast %41 : vector<1x128xf32> to vector<1x1x128xf32>
    tpu.vector_store %arg4[%c0_17, %42, %c0_18], %45 {strides = array<i32>} : memref<2x8x128xf32, #tpu.memory_space<vmem>>, vector<1x1x128xf32>,
    %c4_i32 = arith.constant 4 : i32
    %46 = arith.addi %1, %c4_i32 : i32
    %47 = arith.index_cast %46 : i32 to index
    %48 = memref.load %arg1[%47] : memref<48xi32, #tpu.memory_space<smem>>
    %c0_i32_19 = arith.constant 0 : i32
    %c63_i32_20 = arith.constant 63 : i32
    %49 = arith.maxsi %c0_i32_19, %48 : i32
    %50 = arith.minsi %c63_i32_20, %49 : i32
    %51 = arith.index_cast %50 : i32 to index
    %c0_21 = arith.constant 0 : index
    %52 = vector.load %arg3[%51, %c0_21] : memref<64x128xf32, #tpu.memory_space<vmem>>, vector<1x128xf32>
    %c0_22 = arith.constant 0 : index
    %53 = arith.index_cast %c4_i32 : i32 to index
    %c0_23 = arith.constant 0 : index
    %54 = vector.load %arg4[%c0_22, %53, %c0_23] : memref<2x8x128xf32, #tpu.memory_space<vmem>>, vector<1x1x128xf32>
    %55 = vector.shape_cast %54 : vector<1x1x128xf32> to vector<1x128xf32>
    %56 = vector.shape_cast %52 : vector<1x128xf32> to vector<1x1x128xf32>
    tpu.vector_store %arg4[%c0_22, %53, %c0_23], %56 {strides = array<i32>} : memref<2x8x128xf32, #tpu.memory_space<vmem>>, vector<1x1x128xf32>,
    %c5_i32 = arith.constant 5 : i32
    %57 = arith.addi %1, %c5_i32 : i32
    %58 = arith.index_cast %57 : i32 to index
    %59 = memref.load %arg1[%58] : memref<48xi32, #tpu.memory_space<smem>>
    %c0_i32_24 = arith.constant 0 : i32
    %c63_i32_25 = arith.constant 63 : i32
    %60 = arith.maxsi %c0_i32_24, %59 : i32
    %61 = arith.minsi %c63_i32_25, %60 : i32
    %62 = arith.index_cast %61 : i32 to index
    %c0_26 = arith.constant 0 : index
    %63 = vector.load %arg3[%62, %c0_26] : memref<64x128xf32, #tpu.memory_space<vmem>>, vector<1x128xf32>
    %c0_27 = arith.constant 0 : index
    %64 = arith.index_cast %c5_i32 : i32 to index
    %c0_28 = arith.constant 0 : index
    %65 = vector.load %arg4[%c0_27, %64, %c0_28] : memref<2x8x128xf32, #tpu.memory_space<vmem>>, vector<1x1x128xf32>
    %66 = vector.shape_cast %65 : vector<1x1x128xf32> to vector<1x128xf32>
    %67 = vector.shape_cast %63 : vector<1x128xf32> to vector<1x1x128xf32>
    tpu.vector_store %arg4[%c0_27, %64, %c0_28], %67 {strides = array<i32>} : memref<2x8x128xf32, #tpu.memory_space<vmem>>, vector<1x1x128xf32>,
    %c6_i32 = arith.constant 6 : i32
    %68 = arith.addi %1, %c6_i32 : i32
    %69 = arith.index_cast %68 : i32 to index
    %70 = memref.load %arg1[%69] : memref<48xi32, #tpu.memory_space<smem>>
    %c0_i32_29 = arith.constant 0 : i32
    %c63_i32_30 = arith.constant 63 : i32
    %71 = arith.maxsi %c0_i32_29, %70 : i32
    %72 = arith.minsi %c63_i32_30, %71 : i32
    %73 = arith.index_cast %72 : i32 to index
    %c0_31 = arith.constant 0 : index
    %74 = vector.load %arg3[%73, %c0_31] : memref<64x128xf32, #tpu.memory_space<vmem>>, vector<1x128xf32>
    %c0_32 = arith.constant 0 : index
    %75 = arith.index_cast %c6_i32 : i32 to index
    %c0_33 = arith.constant 0 : index
    %76 = vector.load %arg4[%c0_32, %75, %c0_33] : memref<2x8x128xf32, #tpu.memory_space<vmem>>, vector<1x1x128xf32>
    %77 = vector.shape_cast %76 : vector<1x1x128xf32> to vector<1x128xf32>
    %78 = vector.shape_cast %74 : vector<1x128xf32> to vector<1x1x128xf32>
    tpu.vector_store %arg4[%c0_32, %75, %c0_33], %78 {strides = array<i32>} : memref<2x8x128xf32, #tpu.memory_space<vmem>>, vector<1x1x128xf32>,
    %c7_i32 = arith.constant 7 : i32
    %79 = arith.addi %1, %c7_i32 : i32
    %80 = arith.index_cast %79 : i32 to index
    %81 = memref.load %arg1[%80] : memref<48xi32, #tpu.memory_space<smem>>
    %c0_i32_34 = arith.constant 0 : i32
    %c63_i32_35 = arith.constant 63 : i32
    %82 = arith.maxsi %c0_i32_34, %81 : i32
    %83 = arith.minsi %c63_i32_35, %82 : i32
    %84 = arith.index_cast %83 : i32 to index
    %c0_36 = arith.constant 0 : index
    %85 = vector.load %arg3[%84, %c0_36] : memref<64x128xf32, #tpu.memory_space<vmem>>, vector<1x128xf32>
    %c0_37 = arith.constant 0 : index
    %86 = arith.index_cast %c7_i32 : i32 to index
    %c0_38 = arith.constant 0 : index
    %87 = vector.load %arg4[%c0_37, %86, %c0_38] : memref<2x8x128xf32, #tpu.memory_space<vmem>>, vector<1x1x128xf32>
    %88 = vector.shape_cast %87 : vector<1x1x128xf32> to vector<1x128xf32>
    %89 = vector.shape_cast %85 : vector<1x128xf32> to vector<1x1x128xf32>
    tpu.vector_store %arg4[%c0_37, %86, %c0_38], %89 {strides = array<i32>} : memref<2x8x128xf32, #tpu.memory_space<vmem>>, vector<1x1x128xf32>,
    %c8_i32 = arith.constant 8 : i32
    %c8_i32_39 = arith.constant 8 : i32
    %90 = arith.addi %0, %c8_i32_39 : i32
    %c0_i32_40 = arith.constant 0 : i32
    %91 = arith.addi %90, %c0_i32_40 : i32
    %92 = arith.index_cast %91 : i32 to index
    %93 = memref.load %arg1[%92] : memref<48xi32, #tpu.memory_space<smem>>
    %c0_i32_41 = arith.constant 0 : i32
    %c63_i32_42 = arith.constant 63 : i32
    %94 = arith.maxsi %c0_i32_41, %93 : i32
    %95 = arith.minsi %c63_i32_42, %94 : i32
    %96 = arith.index_cast %95 : i32 to index
    %c0_43 = arith.constant 0 : index
    %97 = vector.load %arg3[%96, %c0_43] : memref<64x128xf32, #tpu.memory_space<vmem>>, vector<1x128xf32>
    %c1 = arith.constant 1 : index
    %98 = arith.index_cast %c0_i32_40 : i32 to index
    %c0_44 = arith.constant 0 : index
    %99 = vector.load %arg4[%c1, %98, %c0_44] : memref<2x8x128xf32, #tpu.memory_space<vmem>>, vector<1x1x128xf32>
    %100 = vector.shape_cast %99 : vector<1x1x128xf32> to vector<1x128xf32>
    %101 = vector.shape_cast %97 : vector<1x128xf32> to vector<1x1x128xf32>
    tpu.vector_store %arg4[%c1, %98, %c0_44], %101 {strides = array<i32>} : memref<2x8x128xf32, #tpu.memory_space<vmem>>, vector<1x1x128xf32>,
    %c1_i32_45 = arith.constant 1 : i32
    %102 = arith.addi %90, %c1_i32_45 : i32
    %103 = arith.index_cast %102 : i32 to index
    %104 = memref.load %arg1[%103] : memref<48xi32, #tpu.memory_space<smem>>
    %c0_i32_46 = arith.constant 0 : i32
    %c63_i32_47 = arith.constant 63 : i32
    %105 = arith.maxsi %c0_i32_46, %104 : i32
    %106 = arith.minsi %c63_i32_47, %105 : i32
    %107 = arith.index_cast %106 : i32 to index
    %c0_48 = arith.constant 0 : index
    %108 = vector.load %arg3[%107, %c0_48] : memref<64x128xf32, #tpu.memory_space<vmem>>, vector<1x128xf32>
    %c1_49 = arith.constant 1 : index
    %109 = arith.index_cast %c1_i32_45 : i32 to index
    %c0_50 = arith.constant 0 : index
    %110 = vector.load %arg4[%c1_49, %109, %c0_50] : memref<2x8x128xf32, #tpu.memory_space<vmem>>, vector<1x1x128xf32>
    %111 = vector.shape_cast %110 : vector<1x1x128xf32> to vector<1x128xf32>
    %112 = vector.shape_cast %108 : vector<1x128xf32> to vector<1x1x128xf32>
    tpu.vector_store %arg4[%c1_49, %109, %c0_50], %112 {strides = array<i32>} : memref<2x8x128xf32, #tpu.memory_space<vmem>>, vector<1x1x128xf32>,
    %c2_i32_51 = arith.constant 2 : i32
    %113 = arith.addi %90, %c2_i32_51 : i32
    %114 = arith.index_cast %113 : i32 to index
    %115 = memref.load %arg1[%114] : memref<48xi32, #tpu.memory_space<smem>>
    %c0_i32_52 = arith.constant 0 : i32
    %c63_i32_53 = arith.constant 63 : i32
    %116 = arith.maxsi %c0_i32_52, %115 : i32
    %117 = arith.minsi %c63_i32_53, %116 : i32
    %118 = arith.index_cast %117 : i32 to index
    %c0_54 = arith.constant 0 : index
    %119 = vector.load %arg3[%118, %c0_54] : memref<64x128xf32, #tpu.memory_space<vmem>>, vector<1x128xf32>
    %c1_55 = arith.constant 1 : index
    %120 = arith.index_cast %c2_i32_51 : i32 to index
    %c0_56 = arith.constant 0 : index
    %121 = vector.load %arg4[%c1_55, %120, %c0_56] : memref<2x8x128xf32, #tpu.memory_space<vmem>>, vector<1x1x128xf32>
    %122 = vector.shape_cast %121 : vector<1x1x128xf32> to vector<1x128xf32>
    %123 = vector.shape_cast %119 : vector<1x128xf32> to vector<1x1x128xf32>
    tpu.vector_store %arg4[%c1_55, %120, %c0_56], %123 {strides = array<i32>} : memref<2x8x128xf32, #tpu.memory_space<vmem>>, vector<1x1x128xf32>,
    %c3_i32_57 = arith.constant 3 : i32
    %124 = arith.addi %90, %c3_i32_57 : i32
    %125 = arith.index_cast %124 : i32 to index
    %126 = memref.load %arg1[%125] : memref<48xi32, #tpu.memory_space<smem>>
    %c0_i32_58 = arith.constant 0 : i32
    %c63_i32_59 = arith.constant 63 : i32
    %127 = arith.maxsi %c0_i32_58, %126 : i32
    %128 = arith.minsi %c63_i32_59, %127 : i32
    %129 = arith.index_cast %128 : i32 to index
    %c0_60 = arith.constant 0 : index
    %130 = vector.load %arg3[%129, %c0_60] : memref<64x128xf32, #tpu.memory_space<vmem>>, vector<1x128xf32>
    %c1_61 = arith.constant 1 : index
    %131 = arith.index_cast %c3_i32_57 : i32 to index
    %c0_62 = arith.constant 0 : index
    %132 = vector.load %arg4[%c1_61, %131, %c0_62] : memref<2x8x128xf32, #tpu.memory_space<vmem>>, vector<1x1x128xf32>
    %133 = vector.shape_cast %132 : vector<1x1x128xf32> to vector<1x128xf32>
    %134 = vector.shape_cast %130 : vector<1x128xf32> to vector<1x1x128xf32>
    tpu.vector_store %arg4[%c1_61, %131, %c0_62], %134 {strides = array<i32>} : memref<2x8x128xf32, #tpu.memory_space<vmem>>, vector<1x1x128xf32>,
    %c4_i32_63 = arith.constant 4 : i32
    %135 = arith.addi %90, %c4_i32_63 : i32
    %136 = arith.index_cast %135 : i32 to index
    %137 = memref.load %arg1[%136] : memref<48xi32, #tpu.memory_space<smem>>
    %c0_i32_64 = arith.constant 0 : i32
    %c63_i32_65 = arith.constant 63 : i32
    %138 = arith.maxsi %c0_i32_64, %137 : i32
    %139 = arith.minsi %c63_i32_65, %138 : i32
    %140 = arith.index_cast %139 : i32 to index
    %c0_66 = arith.constant 0 : index
    %141 = vector.load %arg3[%140, %c0_66] : memref<64x128xf32, #tpu.memory_space<vmem>>, vector<1x128xf32>
    %c1_67 = arith.constant 1 : index
    %142 = arith.index_cast %c4_i32_63 : i32 to index
    %c0_68 = arith.constant 0 : index
    %143 = vector.load %arg4[%c1_67, %142, %c0_68] : memref<2x8x128xf32, #tpu.memory_space<vmem>>, vector<1x1x128xf32>
    %144 = vector.shape_cast %143 : vector<1x1x128xf32> to vector<1x128xf32>
    %145 = vector.shape_cast %141 : vector<1x128xf32> to vector<1x1x128xf32>
    tpu.vector_store %arg4[%c1_67, %142, %c0_68], %145 {strides = array<i32>} : memref<2x8x128xf32, #tpu.memory_space<vmem>>, vector<1x1x128xf32>,
    %c5_i32_69 = arith.constant 5 : i32
    %146 = arith.addi %90, %c5_i32_69 : i32
    %147 = arith.index_cast %146 : i32 to index
    %148 = memref.load %arg1[%147] : memref<48xi32, #tpu.memory_space<smem>>
    %c0_i32_70 = arith.constant 0 : i32
    %c63_i32_71 = arith.constant 63 : i32
    %149 = arith.maxsi %c0_i32_70, %148 : i32
    %150 = arith.minsi %c63_i32_71, %149 : i32
    %151 = arith.index_cast %150 : i32 to index
    %c0_72 = arith.constant 0 : index
    %152 = vector.load %arg3[%151, %c0_72] : memref<64x128xf32, #tpu.memory_space<vmem>>, vector<1x128xf32>
    %c1_73 = arith.constant 1 : index
    %153 = arith.index_cast %c5_i32_69 : i32 to index
    %c0_74 = arith.constant 0 : index
    %154 = vector.load %arg4[%c1_73, %153, %c0_74] : memref<2x8x128xf32, #tpu.memory_space<vmem>>, vector<1x1x128xf32>
    %155 = vector.shape_cast %154 : vector<1x1x128xf32> to vector<1x128xf32>
    %156 = vector.shape_cast %152 : vector<1x128xf32> to vector<1x1x128xf32>
    tpu.vector_store %arg4[%c1_73, %153, %c0_74], %156 {strides = array<i32>} : memref<2x8x128xf32, #tpu.memory_space<vmem>>, vector<1x1x128xf32>,
    %c6_i32_75 = arith.constant 6 : i32
    %157 = arith.addi %90, %c6_i32_75 : i32
    %158 = arith.index_cast %157 : i32 to index
    %159 = memref.load %arg1[%158] : memref<48xi32, #tpu.memory_space<smem>>
    %c0_i32_76 = arith.constant 0 : i32
    %c63_i32_77 = arith.constant 63 : i32
    %160 = arith.maxsi %c0_i32_76, %159 : i32
    %161 = arith.minsi %c63_i32_77, %160 : i32
    %162 = arith.index_cast %161 : i32 to index
    %c0_78 = arith.constant 0 : index
    %163 = vector.load %arg3[%162, %c0_78] : memref<64x128xf32, #tpu.memory_space<vmem>>, vector<1x128xf32>
    %c1_79 = arith.constant 1 : index
    %164 = arith.index_cast %c6_i32_75 : i32 to index
    %c0_80 = arith.constant 0 : index
    %165 = vector.load %arg4[%c1_79, %164, %c0_80] : memref<2x8x128xf32, #tpu.memory_space<vmem>>, vector<1x1x128xf32>
    %166 = vector.shape_cast %165 : vector<1x1x128xf32> to vector<1x128xf32>
    %167 = vector.shape_cast %163 : vector<1x128xf32> to vector<1x1x128xf32>
    tpu.vector_store %arg4[%c1_79, %164, %c0_80], %167 {strides = array<i32>} : memref<2x8x128xf32, #tpu.memory_space<vmem>>, vector<1x1x128xf32>,
    %c7_i32_81 = arith.constant 7 : i32
    %168 = arith.addi %90, %c7_i32_81 : i32
    %169 = arith.index_cast %168 : i32 to index
    %170 = memref.load %arg1[%169] : memref<48xi32, #tpu.memory_space<smem>>
    %c0_i32_82 = arith.constant 0 : i32
    %c63_i32_83 = arith.constant 63 : i32
    %171 = arith.maxsi %c0_i32_82, %170 : i32
    %172 = arith.minsi %c63_i32_83, %171 : i32
    %173 = arith.index_cast %172 : i32 to index
    %c0_84 = arith.constant 0 : index
    %174 = vector.load %arg3[%173, %c0_84] : memref<64x128xf32, #tpu.memory_space<vmem>>, vector<1x128xf32>
    %c1_85 = arith.constant 1 : index
    %175 = arith.index_cast %c7_i32_81 : i32 to index
    %c0_86 = arith.constant 0 : index
    %176 = vector.load %arg4[%c1_85, %175, %c0_86] : memref<2x8x128xf32, #tpu.memory_space<vmem>>, vector<1x1x128xf32>
    %177 = vector.shape_cast %176 : vector<1x1x128xf32> to vector<1x128xf32>
    %178 = vector.shape_cast %174 : vector<1x128xf32> to vector<1x1x128xf32>
    tpu.vector_store %arg4[%c1_85, %175, %c0_86], %178 {strides = array<i32>} : memref<2x8x128xf32, #tpu.memory_space<vmem>>, vector<1x1x128xf32>,
    %c8_i32_87 = arith.constant 8 : i32
    %c0_88 = arith.constant 0 : index
    %c0_89 = arith.constant 0 : index
    %c0_90 = arith.constant 0 : index
    %179 = vector.load %arg4[%c0_88, %c0_89, %c0_90] : memref<2x8x128xf32, #tpu.memory_space<vmem>>, vector<2x8x128xf32>
    %c0_91 = arith.constant 0 : index
    %c0_92 = arith.constant 0 : index
    %180 = vector.load %arg2[%c0_91, %c0_92] : memref<8x128xf32, #tpu.memory_space<vmem>>, vector<8x128xf32>
    %181 = vector.shape_cast %180 : vector<8x128xf32> to vector<1x8x128xf32>
    %182 = vector.broadcast %181 : vector<1x8x128xf32> to vector<2x8x128xf32>
    %183 = arith.addf %179, %182 : vector<2x8x128xf32>
    %c0_93 = arith.constant 0 : index
    %c0_94 = arith.constant 0 : index
    %c0_95 = arith.constant 0 : index
    %184 = vector.load %arg4[%c0_93, %c0_94, %c0_95] : memref<2x8x128xf32, #tpu.memory_space<vmem>>, vector<2x8x128xf32>
    tpu.vector_store %arg4[%c0_93, %c0_94, %c0_95], %183 {strides = array<i32>} : memref<2x8x128xf32, #tpu.memory_space<vmem>>, vector<2x8x128xf32>,
    return
  }
  func.func @transform_0(%arg0: i32, %arg1: memref<48xi32, #tpu.memory_space<smem>>) -> (i32, i32) {
    %c0_i32 = arith.constant 0 : i32
    %c0_i32_0 = arith.constant 0 : i32
    %c0_i32_1 = arith.constant 0 : i32
    return %c0_i32, %c0_i32_0 : i32, i32
  }
  func.func @transform_1(%arg0: i32, %arg1: memref<48xi32, #tpu.memory_space<smem>>) -> (i32, i32) {
    %c0_i32 = arith.constant 0 : i32
    %c0_i32_0 = arith.constant 0 : i32
    %c0_i32_1 = arith.constant 0 : i32
    return %c0_i32, %c0_i32_0 : i32, i32
  }
  func.func @transform_2(%arg0: i32, %arg1: memref<48xi32, #tpu.memory_space<smem>>) -> (i32, i32, i32) {
    %c0_i32 = arith.constant 0 : i32
    %c0_i32_0 = arith.constant 0 : i32
    %c0_i32_1 = arith.constant 0 : i32
    return %arg0, %c0_i32, %c0_i32_0 : i32, i32, i32
  }
}

</mosaic_0001>

<llo_original>
// kernel: tpu_custom_call.1
$region0: #{tpu_custom_call.1}
  #allocation0 [shape = 'u32[]', space=smem, size = 0x4, offset = 0x4, fixed_abs, tag = 'smem constant byte address 0x4 - core index']
  #allocation1 [shape = 'u32[72,128]{1,0:T(1,128)}', space=vmem, size = 0x9000, scoped, tag = 'internal scratch']
  #allocation2 [shape = 's32[1]{0}', space=sflag, size = 0x4, scoped, tag = 'scoped memory for tpu_custom_call.1']
  #allocation3 [shape = 'u8[512]{0}', space=smem, size = 0x200, scoped, tag = 'prefetched SMEM operand 0']
  %s0 = inlined_call_operand.hbm [shape: s32[48], index: 0, kind: input, shape index: {}]
  %s1 = inlined_call_operand.hbm [shape: f32[8,128], index: 1, kind: input, shape index: {}]
  %s2 = inlined_call_operand.hbm [shape: f32[64,128], index: 2, kind: input, shape index: {}]
  %s3 = inlined_call_operand.hbm [shape: f32[6,8,128], index: 3, kind: output, shape index: {}]
  %s4 = sld [smem:[#allocation0]]
  $region49: #{tpu_custom_call.1} parent=0
    _
  %s6 = ssub.s32 1, %s4
  %s7 = scalar_select 0, %s6, %s4
  %s9 = sshll.u32 %s0, 4
  %s10 = int_to_ptr.hbm [resolvable:$true] %s9
  %12 = dma.hbm_to_smem %s10, 16, [#allocation3], [#allocation2]
  %14 = dma.done [#allocation2], 16
  %15 = sfence
  $region1: #{tpu_custom_call.1} parent=0
    #allocation4 [shape = 'u8[4096]{0}', space=vmem, size = 0x1000, scoped, tag = 'input window, operand 1, single buffered']
    #allocation5 [shape = 's32[2]{0}', space=sflag, size = 0x8, scoped, tag = 'scoped memory for tpu_custom_call.1']
    #allocation6 [shape = 's32[2]{0}', space=sflag, size = 0x8, scoped, tag = 'scoped memory for tpu_custom_call.1']
    #allocation7 [shape = 'u8[32768]{0}', space=vmem, size = 0x8000, scoped, tag = 'input window, operand 2, single buffered']
    #allocation8 [shape = 's32[1]{0}', space=sflag, size = 0x4, scoped, tag = 'scoped memory for tpu_custom_call.1']
    #allocation9 [shape = 'u8[16384]{0}', space=vmem, size = 0x4000, scoped, tag = 'output window, operand 0']
    %16 = vsyncpa [#allocation5], 0
    %17 = vsyncpa [#allocation8], 0
    %18 = vsyncpa [#allocation6], 0
    %s19 = scalar_lea.sflag [#allocation6], 1
    %20 = vsyncpa %s19, 0
    loop: start=0, step=1, limit=5
    $region2: #{tpu_custom_call.1} parent=1 // loop_pre_header
      _
    $region3: #{tpu_custom_call.1} parent=1 // loop_header
      %s22 = sphi 0, %s26
      %p23 = scmp.ge.s32.totalorder %s22, 5
      %s30 = sphi 0, %s30
      %s32 = sphi 0, %s30
      %s33 = sphi 0, %s32
      %s47 = sphi 0, %s33
      %s51 = sphi 0, %s51
      %s53 = sphi 0, %s51
      %s54 = sphi 0, %s53
      %s68 = sphi 0, %s54
      %s74 = sphi 0, %s76
      %s77 = sphi 0, %s74
      %s78 = sphi 0, %s77
      %s94 = sphi 0, %s78
    $region4: #{tpu_custom_call.1} parent=1 // loop_header_branch
      %25 = sbr.rel (%p23) target = $region8
    $region5: #{tpu_custom_call.1} parent=1 // loop_body
      %s27 = ssub.s32 %s22, 1
      %s28 = ssub.s32 %s22, 2
      %s29 = sadd.s32 %s22, 1
      %s31 = sadd.s32 %s30, 1
      %p34 = scmp.eq.s32.totalorder %s22, 2
      %p35 = scmp.ne.s32.totalorder %s30, %s32
      %p36 = scmp.eq.s32.totalorder %s22, 0
      %p37 = por %p35, %p36
      %p38 = scmp.ne.s32.totalorder %s30, %s32
      %p39 = scmp.eq.s32.totalorder %s27, 2
      %p40 = por %p38, %p39
      %p41 = scmp.ne.s32.totalorder %s32, %s33
      %p42 = scmp.eq.s32.totalorder %s27, 0
      %p43 = por %p41, %p42
      %p44 = scmp.ne.s32.totalorder %s32, %s33
      %p45 = scmp.eq.s32.totalorder %s28, 2
      %p46 = por %p44, %p45
      %p48 = scmp.ne.s32.totalorder %s33, %s47
      %p49 = scmp.eq.s32.totalorder %s28, 0
      %p50 = por %p48, %p49
      %s52 = sadd.s32 %s51, 1
      %p55 = scmp.eq.s32.totalorder %s22, 2
      %p56 = scmp.ne.s32.totalorder %s51, %s53
      %p57 = scmp.eq.s32.totalorder %s22, 0
      %p58 = por %p56, %p57
      %p59 = scmp.ne.s32.totalorder %s51, %s53
      %p60 = scmp.eq.s32.totalorder %s27, 2
      %p61 = por %p59, %p60
      %p62 = scmp.ne.s32.totalorder %s53, %s54
      %p63 = scmp.eq.s32.totalorder %s27, 0
      %p64 = por %p62, %p63
      %p65 = scmp.ne.s32.totalorder %s53, %s54
      %p66 = scmp.eq.s32.totalorder %s28, 2
      %p67 = por %p65, %p66
      %p69 = scmp.ne.s32.totalorder %s54, %s68
      %p70 = scmp.eq.s32.totalorder %s28, 0
      %p71 = por %p69, %p70
      %s72 = ssub.s32 %s22, %s29
      %p73 = scmp.eq.s32.totalorder %s72, 0
      %s75 = sadd.s32 %s74, 1
      %s76 = scalar_select %p73, %s74, %s75
      %p79 = pneg %p73
      %p80 = scmp.eq.s32.totalorder %s22, 2
      %p81 = por %p79, %p80
      %p82 = scmp.ne.s32.totalorder %s74, %s77
      %p83 = scmp.eq.s32.totalorder %s22, 0
      %p84 = por %p82, %p83
      %p85 = scmp.ne.s32.totalorder %s74, %s77
      %p86 = scmp.eq.s32.totalorder %s27, 2
      %p87 = por %p85, %p86
      %p88 = scmp.ne.s32.totalorder %s77, %s78
      %p89 = scmp.eq.s32.totalorder %s27, 0
      %p90 = por %p88, %p89
      %p91 = scmp.ne.s32.totalorder %s77, %s78
      %p92 = scmp.eq.s32.totalorder %s28, 2
      %p93 = por %p91, %p92
      %p95 = scmp.ne.s32.totalorder %s78, %s94
      %p96 = scmp.eq.s32.totalorder %s28, 0
      %p97 = por %p95, %p96
      %p98 = scmp.le.s32.totalorder 1, %s22
      %p99 = scmp.lt.s32.totalorder %s22, 4
      %p100 = pnand %p98, %p99
      %p101 = pneg %p100
      // Predicated region
      $region9: #{tpu_custom_call.1} parent=5 // pred_check
        _
      $region10: #{tpu_custom_call.1} parent=5 // pred_check_branch
        %103 = sbr.rel (%p100) target = $region12
      $region11: #{tpu_custom_call.1} parent=5 // pred_region
        %s104 = ssub.s32 %s22, 1
        // Predicated region
        $region13: #{tpu_custom_call.1} parent=11 // pred_check
          %p105 = pneg %p43
        $region14: #{tpu_custom_call.1} parent=11 // pred_check_branch
          %107 = sbr.rel (%p105) target = $region16
        $region15: #{tpu_custom_call.1} parent=11 // pred_region
          %109 = vsyncadd [#allocation5], 0
          %s111 = sshll.u32 %s1, 4
          %s112 = int_to_ptr.hbm [resolvable:$true] %s111
          %s113 = sshll.u32 [#allocation4], 4
          %s114 = int_to_ptr.vmem [resolvable:$true] %s113
          %116 = dma.hbm_to_vmem [thread:$0]  %s112, 128, %s114, [#allocation5]
        $region16: #{tpu_custom_call.1} parent=11 // pred_fallthru
          _
        // Predicated region
        $region17: #{tpu_custom_call.1} parent=11 // pred_check
          %p117 = pneg %p64
        $region18: #{tpu_custom_call.1} parent=11 // pred_check_branch
          %119 = sbr.rel (%p117) target = $region20
        $region19: #{tpu_custom_call.1} parent=11 // pred_region
          %121 = vsyncadd [#allocation8], 0
          %s122 = sshll.u32 %s2, 4
          %s123 = int_to_ptr.hbm [resolvable:$true] %s122
          %s124 = sshll.u32 [#allocation7], 4
          %s125 = int_to_ptr.vmem [resolvable:$true] %s124
          %130 = dma.hbm_to_vmem [thread:$0]  %s123, 1024, %s125, [#allocation8], 128, 128, 8
        $region20: #{tpu_custom_call.1} parent=11 // pred_fallthru
          _
      $region12: #{tpu_custom_call.1} parent=5 // pred_fallthru
        _
      %p131 = scmp.lt.s32.totalorder %s22, 3
      // Predicated region
      $region21: #{tpu_custom_call.1} parent=5 // pred_check
        %p132 = pneg %p131
      $region22: #{tpu_custom_call.1} parent=5 // pred_check_branch
        %134 = sbr.rel (%p132) target = $region24
      $region23: #{tpu_custom_call.1} parent=5 // pred_region
        _
      $region24: #{tpu_custom_call.1} parent=5 // pred_fallthru
        _
      %p135 = scmp.le.s32.totalorder 1, %s22
      %p136 = scmp.lt.s32.totalorder %s22, 4
      %p137 = pnand %p135, %p136
      %p138 = pneg %p137
      // Predicated region
      $region25: #{tpu_custom_call.1} parent=5 // pred_check
        _
      $region26: #{tpu_custom_call.1} parent=5 // pred_check_branch
        %140 = sbr.rel (%p137) target = $region28
      $region27: #{tpu_custom_call.1} parent=5 // pred_region
        %s141 = ssub.s32 %s22, 1
        // Predicated region
        $region29: #{tpu_custom_call.1} parent=27 // pred_check
          %p142 = pneg %p43
        $region30: #{tpu_custom_call.1} parent=27 // pred_check_branch
          %144 = sbr.rel (%p142) target = $region32
        $region31: #{tpu_custom_call.1} parent=27 // pred_region
          %146 = dma.done [#allocation5], 128
        $region32: #{tpu_custom_call.1} parent=27 // pred_fallthru
          _
        // Predicated region
        $region33: #{tpu_custom_call.1} parent=27 // pred_check
          %p147 = pneg %p64
        $region34: #{tpu_custom_call.1} parent=27 // pred_check_branch
          %149 = sbr.rel (%p147) target = $region36
        $region35: #{tpu_custom_call.1} parent=27 // pred_region
          %151 = dma.done [#allocation8], 1024
        $region36: #{tpu_custom_call.1} parent=27 // pred_fallthru
          _
        %p152 = pneg %p43
        %p153 = pneg %p40
        %p154 = pneg %p64
        %p155 = pneg %p61
        %p156 = pneg %p90
        %p157 = pneg %p87
        %s158 = sand.u32 %s77, 1
        %s159 = scalar_lea.sflag [#allocation6], %s158
        %s160 = sand.u32 %s77, 1
        %s161 = smul.addr %s160, 16
        %s162 = scalar_lea.vmem [#allocation9], %s161
        %s163 = smul.u32 2, %s27
        %s164 = smul.u32 %s27, 16
        %s165 = sld [smem:[#allocation3 + %s164]]
        %p166 = scmp.gt.s32.totalorder %s165, 0
        %s167 = scalar_select %p166, %s165, 0
        %p168 = scmp.lt.s32.totalorder %s167, 63
        %s169 = scalar_select %p168, %s167, 63
        %s170 = scalar_lea.vmem [#allocation7], %s169
        %v171 = vld [vmem:[%s170] sm:$0x1]
        %172 = vst [vmem:[%s162] sm:$0x1] %v171
        %s173 = sadd.s32 %s164, 1
        %s174 = sld [smem:[#allocation3 + %s173]]
        %p175 = scmp.gt.s32.totalorder %s174, 0
        %s176 = scalar_select %p175, %s174, 0
        %p177 = scmp.lt.s32.totalorder %s176, 63
        %s178 = scalar_select %p177, %s176, 63
        %s179 = scalar_lea.vmem [#allocation7], %s178
        %v180 = vld [vmem:[%s179] sm:$0x1]
        %181 = vst [vmem:[%s162 + $0x1] sm:$0x1] %v180
        %s182 = sadd.s32 %s164, 2
        %s183 = sld [smem:[#allocation3 + %s182]]
        %p184 = scmp.gt.s32.totalorder %s183, 0
        %s185 = scalar_select %p184, %s183, 0
        %p186 = scmp.lt.s32.totalorder %s185, 63
        %s187 = scalar_select %p186, %s185, 63
        %s188 = scalar_lea.vmem [#allocation7], %s187
        %v189 = vld [vmem:[%s188] sm:$0x1]
        %190 = vst [vmem:[%s162 + $0x2] sm:$0x1] %v189
        %s191 = sadd.s32 %s164, 3
        %s192 = sld [smem:[#allocation3 + %s191]]
        %p193 = scmp.gt.s32.totalorder %s192, 0
        %s194 = scalar_select %p193, %s192, 0
        %p195 = scmp.lt.s32.totalorder %s194, 63
        %s196 = scalar_select %p195, %s194, 63
        %s197 = scalar_lea.vmem [#allocation7], %s196
        %v198 = vld [vmem:[%s197] sm:$0x1]
        %199 = vst [vmem:[%s162 + $0x3] sm:$0x1] %v198
        %s200 = sadd.s32 %s164, 4
        %s201 = sld [smem:[#allocation3 + %s200]]
        %p202 = scmp.gt.s32.totalorder %s201, 0
        %s203 = scalar_select %p202, %s201, 0
        %p204 = scmp.lt.s32.totalorder %s203, 63
        %s205 = scalar_select %p204, %s203, 63
        %s206 = scalar_lea.vmem [#allocation7], %s205
        %v207 = vld [vmem:[%s206] sm:$0x1]
        %208 = vst [vmem:[%s162 + $0x4] sm:$0x1] %v207
        %s209 = sadd.s32 %s164, 5
        %s210 = sld [smem:[#allocation3 + %s209]]
        %p211 = scmp.gt.s32.totalorder %s210, 0
        %s212 = scalar_select %p211, %s210, 0
        %p213 = scmp.lt.s32.totalorder %s212, 63
        %s214 = scalar_select %p213, %s212, 63
        %s215 = scalar_lea.vmem [#allocation7], %s214
        %v216 = vld [vmem:[%s215] sm:$0x1]
        %217 = vst [vmem:[%s162 + $0x5] sm:$0x1] %v216
        %s218 = sadd.s32 %s164, 6
        %s219 = sld [smem:[#allocation3 + %s218]]
        %p220 = scmp.gt.s32.totalorder %s219, 0
        %s221 = scalar_select %p220, %s219, 0
        %p222 = scmp.lt.s32.totalorder %s221, 63
        %s223 = scalar_select %p222, %s221, 63
        %s224 = scalar_lea.vmem [#allocation7], %s223
        %v225 = vld [vmem:[%s224] sm:$0x1]
        %226 = vst [vmem:[%s162 + $0x6] sm:$0x1] %v225
        %s227 = sadd.s32 %s164, 7
        %s228 = sld [smem:[#allocation3 + %s227]]
        %p229 = scmp.gt.s32.totalorder %s228, 0
        %s230 = scalar_select %p229, %s228, 0
        %p231 = scmp.lt.s32.totalorder %s230, 63
        %s232 = scalar_select %p231, %s230, 63
        %s233 = scalar_lea.vmem [#allocation7], %s232
        %v234 = vld [vmem:[%s233] sm:$0x1]
        %235 = vst [vmem:[%s162 + $0x7] sm:$0x1] %v234
        %s236 = sadd.s32 %s164, 8
        %s237 = sld [smem:[#allocation3 + %s236]]
        %p238 = scmp.gt.s32.totalorder %s237, 0
        %s239 = scalar_select %p238, %s237, 0
        %p240 = scmp.lt.s32.totalorder %s239, 63
        %s241 = scalar_select %p240, %s239, 63
        %s242 = scalar_lea.vmem [#allocation7], %s241
        %v243 = vld [vmem:[%s242] sm:$0x1]
        %s244 = scalar_lea.vmem %s162, 8 [#allocation9]
        %245 = vst [vmem:[%s244] sm:$0x1] %v243
        %s246 = sadd.s32 %s164, 9
        %s247 = sld [smem:[#allocation3 + %s246]]
        %p248 = scmp.gt.s32.totalorder %s247, 0
        %s249 = scalar_select %p248, %s247, 0
        %p250 = scmp.lt.s32.totalorder %s249, 63
        %s251 = scalar_select %p250, %s249, 63
        %s252 = scalar_lea.vmem [#allocation7], %s251
        %v253 = vld [vmem:[%s252] sm:$0x1]
        %254 = vst [vmem:[%s244 + $0x1] sm:$0x1] %v253
        %s255 = sadd.s32 %s164, 10
        %s256 = sld [smem:[#allocation3 + %s255]]
        %p257 = scmp.gt.s32.totalorder %s256, 0
        %s258 = scalar_select %p257, %s256, 0
        %p259 = scmp.lt.s32.totalorder %s258, 63
        %s260 = scalar_select %p259, %s258, 63
        %s261 = scalar_lea.vmem [#allocation7], %s260
        %v262 = vld [vmem:[%s261] sm:$0x1]
        %263 = vst [vmem:[%s244 + $0x2] sm:$0x1] %v262
        %s264 = sadd.s32 %s164, 11
        %s265 = sld [smem:[#allocation3 + %s264]]
        %p266 = scmp.gt.s32.totalorder %s265, 0
        %s267 = scalar_select %p266, %s265, 0
        %p268 = scmp.lt.s32.totalorder %s267, 63
        %s269 = scalar_select %p268, %s267, 63
        %s270 = scalar_lea.vmem [#allocation7], %s269
        %v271 = vld [vmem:[%s270] sm:$0x1]
        %272 = vst [vmem:[%s244 + $0x3] sm:$0x1] %v271
        %s273 = sadd.s32 %s164, 12
        %s274 = sld [smem:[#allocation3 + %s273]]
        %p275 = scmp.gt.s32.totalorder %s274, 0
        %s276 = scalar_select %p275, %s274, 0
        %p277 = scmp.lt.s32.totalorder %s276, 63
        %s278 = scalar_select %p277, %s276, 63
        %s279 = scalar_lea.vmem [#allocation7], %s278
        %v280 = vld [vmem:[%s279] sm:$0x1]
        %281 = vst [vmem:[%s244 + $0x4] sm:$0x1] %v280
        %s282 = sadd.s32 %s164, 13
        %s283 = sld [smem:[#allocation3 + %s282]]
        %p284 = scmp.gt.s32.totalorder %s283, 0
        %s285 = scalar_select %p284, %s283, 0
        %p286 = scmp.lt.s32.totalorder %s285, 63
        %s287 = scalar_select %p286, %s285, 63
        %s288 = scalar_lea.vmem [#allocation7], %s287
        %v289 = vld [vmem:[%s288] sm:$0x1]
        %290 = vst [vmem:[%s244 + $0x5] sm:$0x1] %v289
        %s291 = sadd.s32 %s164, 14
        %s292 = sld [smem:[#allocation3 + %s291]]
        %p293 = scmp.gt.s32.totalorder %s292, 0
        %s294 = scalar_select %p293, %s292, 0
        %p295 = scmp.lt.s32.totalorder %s294, 63
        %s296 = scalar_select %p295, %s294, 63
        %s297 = scalar_lea.vmem [#allocation7], %s296
        %v298 = vld [vmem:[%s297] sm:$0x1]
        %299 = vst [vmem:[%s244 + $0x6] sm:$0x1] %v298
        %s300 = sadd.s32 %s164, 15
        %s301 = sld [smem:[#allocation3 + %s300]]
        %p302 = scmp.gt.s32.totalorder %s301, 0
        %s303 = scalar_select %p302, %s301, 0
        %p304 = scmp.lt.s32.totalorder %s303, 63
        %s305 = scalar_select %p304, %s303, 63
        %s306 = scalar_lea.vmem [#allocation7], %s305
        %v307 = vld [vmem:[%s306] sm:$0x1]
        %308 = vst [vmem:[%s244 + $0x7] sm:$0x1] %v307
        %v309 = vld [vmem:[%s162] sm:$0xff]
        %v310 = vld [vmem:[%s162 + $0x8] sm:$0xff]
        %v311 = vld [vmem:[#allocation4] sm:$0xff]
        %v312 = vadd.f32 %v309, %v311
        %v313 = vadd.f32 %v310, %v311
        %314 = vst [vmem:[%s162] sm:$0xff] %v312
        %315 = vst [vmem:[%s162 + $0x8] sm:$0xff] %v313
        %s316 = sand.u32 %s77, 1
        %s317 = scalar_lea.sflag [#allocation6], %s316
        %s318 = sand.u32 %s77, 1
        %s319 = smul.addr %s318, 16
        %s320 = scalar_lea.vmem [#allocation9], %s319
        // Predicated region
        $region37: #{tpu_custom_call.1} parent=27 // pred_check
          %p321 = pneg %p87
        $region38: #{tpu_custom_call.1} parent=27 // pred_check_branch
          %323 = sbr.rel (%p321) target = $region40
        $region39: #{tpu_custom_call.1} parent=27 // pred_region
          %s324 = smul.u32 2, %s27
          %326 = vsyncadd %s317, 0
          %s327 = smul.addr %s324, 8
          %s328 = scalar_lea.hbm %s3, %s327
          %s329 = sshll.u32 %s320, 4
          %s330 = int_to_ptr.vmem [resolvable:$true] %s329
          %s331 = sshll.u32 %s328, 4
          %s332 = int_to_ptr.hbm [resolvable:$true] %s331
          %337 = dma.vmem_to_hbm [thread:$0]  %s330, 256, %s332, %s317, 128, 128, 8
        $region40: #{tpu_custom_call.1} parent=27 // pred_fallthru
          _
      $region28: #{tpu_custom_call.1} parent=5 // pred_fallthru
        _
      %p338 = scmp.le.s32.totalorder 2, %s22
      // Predicated region
      $region41: #{tpu_custom_call.1} parent=5 // pred_check
        %p339 = pneg %p338
      $region42: #{tpu_custom_call.1} parent=5 // pred_check_branch
        %341 = sbr.rel (%p339) target = $region44
      $region43: #{tpu_custom_call.1} parent=5 // pred_region
        %s342 = ssub.s32 %s22, 2
        // Predicated region
        $region45: #{tpu_custom_call.1} parent=43 // pred_check
          %p343 = pneg %p93
        $region46: #{tpu_custom_call.1} parent=43 // pred_check_branch
          %345 = sbr.rel (%p343) target = $region48
        $region47: #{tpu_custom_call.1} parent=43 // pred_region
          %s346 = sand.u32 %s78, 1
          %s347 = scalar_lea.sflag [#allocation6], %s346
          %s348 = sand.u32 %s78, 1
          %s349 = smul.addr %s348, 16
          %s350 = scalar_lea.vmem [#allocation9], %s349
          %352 = dma.done %s347, 256
        $region48: #{tpu_custom_call.1} parent=43 // pred_fallthru
          _
      $region44: #{tpu_custom_call.1} parent=5 // pred_fallthru
        _
    $region6: #{tpu_custom_call.1} parent=1 // loop_footer
      %s26 = sadd.s32 1, %s22
    $region7: #{tpu_custom_call.1} parent=1 // loop_footer_branch
      %21 = sbr.rel target = $region3
    $region8: #{tpu_custom_call.1} parent=1 // loop_exit
      _
    %353 = vsyncpa [#allocation5], 1
    %s354 = scalar_lea.sflag [#allocation5], 1
    %355 = vsyncpa %s354, 1
    %356 = vsyncpa [#allocation8], 1
    %357 = vsyncpa [#allocation6], 1
    %s358 = scalar_lea.sflag [#allocation6], 1
    %359 = vsyncpa %s358, 1

</llo_original>
